<compile_context>
chip_gen: v7x
topology: tpu7x:2x2x1
jax: 0.10.0
libtpu: 0.0.40
codegen_flags: <defaults>
</compile_context>

<pallas_src>
import functools
import math

import jax
import jax.numpy as jnp
from jax.experimental import pallas as pl
from jax.experimental.pallas import tpu as pltpu

_VMEM_LIMIT = 32 * 1024 * 1024  # raise v5e's 16 MiB default; <= v6e/v7x defaults


# ----------------------------------------------------------------------------
# tile helpers
# ----------------------------------------------------------------------------

def _pick_tile(dim, target, mult):
    """Largest divisor of `dim` that is <= target and a multiple of `mult`.
    If dim <= target, the full dim is used (full-dim exception).  Raises for
    awkward dims instead of silently falling back to a whole-array block."""
    if dim <= target:
        return dim
    t = (target // mult) * mult
    while t >= mult:
        if dim % t == 0:
            return t
        t -= mult
    raise ValueError(
        f"dim {dim} has no tile <= {target} that is a multiple of {mult}; "
        f"pad it to a multiple of {mult}")


# ----------------------------------------------------------------------------
# weight-resident linear:  y = act(x @ W + b)
#   grid over rows only; W block index is constant -> fetched from HBM once.
# ----------------------------------------------------------------------------

def _linear_kernel(x_ref, w_ref, b_ref, o_ref, *, act):
    y = jnp.dot(x_ref[...], w_ref[...], preferred_element_type=jnp.float32)
    y = y + b_ref[...]
    if act == "gelu":
        # tanh-approx GELU -> EUP (free slot next to the MXU epilogue)
        y = jax.nn.gelu(y, approximate=True)
    elif act == "tanh":
        y = jnp.tanh(y)
    o_ref[...] = y.astype(o_ref.dtype)


def linear(x, w, b, act="none", tm_target=256):
    """x: (M, K) bf16, w: (K, N) bf16, b: (N,) f32  ->  (M, N) bf16."""
    M, K = x.shape
    K2, N = w.shape
    assert K == K2
    tm = _pick_tile(M, tm_target, 8)
    return pl.pallas_call(
        functools.partial(_linear_kernel, act=act),
        out_shape=jax.ShapeDtypeStruct((M, N), x.dtype),
        grid_spec=pltpu.PrefetchScalarGridSpec(
            num_scalar_prefetch=0,
            grid=(M // tm,),
            in_specs=[
                pl.BlockSpec((tm, K), lambda i: (i, 0)),
                pl.BlockSpec((K, N), lambda i: (0, 0)),   # weight-resident
                pl.BlockSpec((1, N), lambda i: (0, 0)),
            ],
            out_specs=pl.BlockSpec((tm, N), lambda i: (i, 0)),
        ),
        compiler_params=pltpu.CompilerParams(
            dimension_semantics=("parallel",),
            vmem_limit_bytes=_VMEM_LIMIT),
    )(x, w, b.reshape(1, N))


# ----------------------------------------------------------------------------
# weight-resident linear with fused residual-add + LayerNorm epilogue
#   y = LN(x @ W + b + residual) * gamma + beta     (LN stats in f32)
# ----------------------------------------------------------------------------

def _linear_add_ln_kernel(x_ref, w_ref, b_ref, r_ref, g_ref, bb_ref, o_ref, *, eps):
    y = jnp.dot(x_ref[...], w_ref[...], preferred_element_type=jnp.float32)
    y = y + b_ref[...] + r_ref[...].astype(jnp.float32)
    mu = jnp.mean(y, axis=-1, keepdims=True)
    var = jnp.mean((y - mu) ** 2, axis=-1, keepdims=True)
    inv = jax.lax.rsqrt(var + eps)
    o_ref[...] = ((y - mu) * inv * g_ref[...] + bb_ref[...]).astype(o_ref.dtype)


def linear_add_layernorm(x, w, b, residual, gamma, beta, eps=1e-12):
    M, K = x.shape
    K2, N = w.shape
    assert K == K2 and residual.shape == (M, N)
    tm = _pick_tile(M, 256, 8)
    return pl.pallas_call(
        functools.partial(_linear_add_ln_kernel, eps=eps),
        out_shape=jax.ShapeDtypeStruct((M, N), residual.dtype),
        grid_spec=pltpu.PrefetchScalarGridSpec(
            num_scalar_prefetch=0,
            grid=(M // tm,),
            in_specs=[
                pl.BlockSpec((tm, K), lambda i: (i, 0)),
                pl.BlockSpec((K, N), lambda i: (0, 0)),   # weight-resident
                pl.BlockSpec((1, N), lambda i: (0, 0)),
                pl.BlockSpec((tm, N), lambda i: (i, 0)),  # residual
                pl.BlockSpec((1, N), lambda i: (0, 0)),
                pl.BlockSpec((1, N), lambda i: (0, 0)),
            ],
            out_specs=pl.BlockSpec((tm, N), lambda i: (i, 0)),
        ),
        compiler_params=pltpu.CompilerParams(
            dimension_semantics=("parallel",),
            vmem_limit_bytes=_VMEM_LIMIT),
    )(x, w, b.reshape(1, N), residual, gamma.reshape(1, N), beta.reshape(1, N))


# ----------------------------------------------------------------------------
# attention: one (batch, head) pair + one query tile per grid step
#   q is pre-scaled (scale folded into W_q); normalization after PV matmul.
# ----------------------------------------------------------------------------

def _attention_kernel(q_ref, k_ref, v_ref, bias_ref, o_ref):
    q = q_ref[0]                                             # (tq, D) bf16
    k = k_ref[0]                                             # (S, D)  bf16
    v = v_ref[0]                                             # (S, D)  bf16
    # q @ k^T without materializing a transpose (contract last dims)
    s = jax.lax.dot_general(q, k, (((1,), (1,)), ((), ())),
                            preferred_element_type=jnp.float32)      # (tq, S)
    s = s + bias_ref[0]                                      # (1, S) broadcast
    m = jnp.max(s, axis=-1, keepdims=True)
    p = jnp.exp(s - m)
    denom = jnp.sum(p, axis=-1, keepdims=True)               # (tq, 1)
    ctx = jnp.dot(p.astype(v.dtype), v,
                  preferred_element_type=jnp.float32)        # (tq, D)
    # normalize AFTER PV: scales (tq, D) instead of (tq, S)
    o_ref[0] = (ctx * pl.reciprocal(denom, approx=True)).astype(o_ref.dtype)


def attention(q, k, v, bias, *, tq):
    """q/k/v: (B*NH, S, D) bf16 (q pre-scaled), bias: (B*NH, 1, S) f32 additive.
    Returns (B*NH, S, D) bf16."""
    BH, S, D = q.shape
    return pl.pallas_call(
        _attention_kernel,
        out_shape=jax.ShapeDtypeStruct((BH, S, D), q.dtype),
        grid_spec=pltpu.PrefetchScalarGridSpec(
            num_scalar_prefetch=0,
            grid=(BH, S // tq),
            in_specs=[
                pl.BlockSpec((1, tq, D), lambda g, i: (g, i, 0)),
                pl.BlockSpec((1, S, D), lambda g, i: (g, 0, 0)),
                pl.BlockSpec((1, S, D), lambda g, i: (g, 0, 0)),
                pl.BlockSpec((1, 1, S), lambda g, i: (g, 0, 0)),
            ],
            out_specs=pl.BlockSpec((1, tq, D), lambda g, i: (g, i, 0)),
        ),
        compiler_params=pltpu.CompilerParams(
            dimension_semantics=("parallel", "parallel"),
            vmem_limit_bytes=_VMEM_LIMIT),
    )(q, k, v, bias)


# ----------------------------------------------------------------------------
# standalone LayerNorm (embeddings only), row-tiled, f32 stats
# ----------------------------------------------------------------------------

def _ln_kernel(x_ref, g_ref, b_ref, o_ref, *, eps):
    x = x_ref[...].astype(jnp.float32)
    mu = jnp.mean(x, axis=-1, keepdims=True)
    var = jnp.mean((x - mu) ** 2, axis=-1, keepdims=True)
    inv = jax.lax.rsqrt(var + eps)
    o_ref[...] = ((x - mu) * inv * g_ref[...] + b_ref[...]).astype(o_ref.dtype)


def layernorm(x, gamma, beta, eps=1e-12, out_dtype=None):
    M, H = x.shape
    tm = _pick_tile(M, 256, 8)
    out_dtype = out_dtype or x.dtype
    return pl.pallas_call(
        functools.partial(_ln_kernel, eps=eps),
        out_shape=jax.ShapeDtypeStruct((M, H), out_dtype),
        grid_spec=pltpu.PrefetchScalarGridSpec(
            num_scalar_prefetch=0,
            grid=(M // tm,),
            in_specs=[
                pl.BlockSpec((tm, H), lambda i: (i, 0)),
                pl.BlockSpec((1, H), lambda i: (0, 0)),
                pl.BlockSpec((1, H), lambda i: (0, 0)),
            ],
            out_specs=pl.BlockSpec((tm, H), lambda i: (i, 0)),
        ),
        compiler_params=pltpu.CompilerParams(
            dimension_semantics=("parallel",),
            vmem_limit_bytes=_VMEM_LIMIT),
    )(x, gamma.reshape(1, H), beta.reshape(1, H))


# ----------------------------------------------------------------------------
# BERT forward (glue in plain JAX, compute in the kernels above)
# ----------------------------------------------------------------------------

def bert_forward(params, cfg, input_ids, token_type_ids, attention_mask):
    B, S = input_ids.shape
    H = cfg["hidden"]
    NH = cfg["heads"]
    DH = H // NH
    M = B * S
    cdt = jnp.bfloat16

    # --- embeddings (gathers are glue); LN consumes the f32 sum directly ---
    emb = (params["word_emb"][input_ids]
           + params["pos_emb"][jnp.arange(S)][None, :, :]
           + params["type_emb"][token_type_ids])                      # (B,S,H) f32
    x = layernorm(emb.reshape(M, H), params["emb_ln_g"], params["emb_ln_b"],
                  out_dtype=cdt)                                      # (M,H) bf16

    # additive attention bias, precomputed once, broadcast over heads
    attn_bias = (1.0 - attention_mask.astype(jnp.float32)) * jnp.float32(-10000.0)
    attn_bias = jnp.broadcast_to(attn_bias[:, None, :], (B, NH, S))
    attn_bias = attn_bias.reshape(B * NH, 1, S)

    scale = 1.0 / math.sqrt(float(DH))
    tq = _pick_tile(S, 128, 8)

    for lp in params["layers"]:
        # fold 1/sqrt(head_dim) into the Q columns of the fused QKV projection
        w_qkv = lp["w_qkv"].at[:, :H].multiply(
            jnp.asarray(scale, lp["w_qkv"].dtype))
        b_qkv = lp["b_qkv"].at[:H].multiply(scale)

        # --- self attention ---
        qkv = linear(x, w_qkv, b_qkv)                                 # (M, 3H)
        qkv = jnp.transpose(qkv.reshape(B, S, 3, NH, DH),
                            (2, 0, 3, 1, 4))                          # (3,B,NH,S,D)
        q = qkv[0].reshape(B * NH, S, DH)
        k = qkv[1].reshape(B * NH, S, DH)
        v = qkv[2].reshape(B * NH, S, DH)
        ctx = attention(q, k, v, attn_bias, tq=tq)                    # (B*NH,S,D)
        ctx = jnp.transpose(ctx.reshape(B, NH, S, DH),
                            (0, 2, 1, 3)).reshape(M, H)               # (M, H)
        x = linear_add_layernorm(ctx, lp["wo"], lp["bo"], x,
                                 lp["ln1_g"], lp["ln1_b"])

        # --- feed-forward (GELU linear uses a smaller row tile) ---
        ff = linear(x, lp["w_inter"], lp["b_inter"], act="gelu", tm_target=128)
        x = linear_add_layernorm(ff, lp["w_out"], lp["b_out"], x,
                                 lp["ln2_g"], lp["ln2_b"])

    sequence_output = x.reshape(B, S, H).astype(jnp.float32)
    cls = x.reshape(B, S, H)[:, 0, :]                                 # (B, H) bf16
    pooled_output = linear(cls, params["wp"], params["bp"],
                           act="tanh").astype(jnp.float32)
    return sequence_output, pooled_output


# ----------------------------------------------------------------------------
# Deterministic parameter init (synthetic, no checkpoint)
# ----------------------------------------------------------------------------

def init_params(key, cfg):
    H = cfg["hidden"]
    I = cfg["intermediate"]
    keys = iter(jax.random.split(key, 8 + 16 * cfg["layers"]))

    def nrm(shape):
        return (0.02 * jax.random.normal(next(keys), shape)).astype(jnp.bfloat16)

    params = {
        "word_emb": (0.02 * jax.random.normal(next(keys), (cfg["vocab"], H))
                     ).astype(jnp.float32),
        "pos_emb":  (0.02 * jax.random.normal(next(keys), (cfg["max_pos"], H))
                     ).astype(jnp.float32),
        "type_emb": (0.02 * jax.random.normal(next(keys), (cfg["type_vocab"], H))
                     ).astype(jnp.float32),
        "emb_ln_g": jnp.ones((H,), jnp.float32),
        "emb_ln_b": jnp.zeros((H,), jnp.float32),
        "wp": nrm((H, H)),
        "bp": jnp.zeros((H,), jnp.float32),
        "layers": [],
    }
    for _ in range(cfg["layers"]):
        # fused QKV weight: (H, 3H) = concat of Wq | Wk | Wv along out-features
        w_qkv = jnp.concatenate([nrm((H, H)), nrm((H, H)), nrm((H, H))], axis=1)
        lp = {
            "w_qkv": w_qkv, "b_qkv": jnp.zeros((3 * H,), jnp.float32),
            "wo": nrm((H, H)), "bo": jnp.zeros((H,), jnp.float32),
            "ln1_g": jnp.ones((H,), jnp.float32),
            "ln1_b": jnp.zeros((H,), jnp.float32),
            "w_inter": nrm((H, I)), "b_inter": jnp.zeros((I,), jnp.float32),
            "w_out":   nrm((I, H)), "b_out":   jnp.zeros((H,), jnp.float32),
            "ln2_g": jnp.ones((H,), jnp.float32),
            "ln2_b": jnp.zeros((H,), jnp.float32),
        }
        params["layers"].append(lp)
    return params


if __name__ == "__main__":
    cfg = dict(vocab=64, hidden=32, heads=4, layers=2,
               intermediate=64, max_pos=16, type_vocab=2)
    B, S = 2, 8

    key = jax.random.PRNGKey(0)
    k_par, k_ids, k_typ = jax.random.split(key, 3)

    params = init_params(k_par, cfg)
    input_ids = jax.random.randint(k_ids, (B, S), 0, cfg["vocab"], dtype=jnp.int32)
    token_type_ids = jax.random.randint(k_typ, (B, S), 0, cfg["type_vocab"],
                                        dtype=jnp.int32)
    attention_mask = jnp.ones((B, S), jnp.float32)

    seq_out, pooled = bert_forward(params, cfg, input_ids, token_type_ids,
                                   attention_mask)
    jax.block_until_ready((seq_out, pooled))
    assert seq_out.shape == (B, S, cfg["hidden"])
    assert pooled.shape == (B, cfg["hidden"])
    assert bool(jnp.all(jnp.isfinite(seq_out))) and bool(jnp.all(jnp.isfinite(pooled)))
    print("KERNEL_OK")
</pallas_src>

<mosaic_0001>
module attributes {stable_mosaic.version = 11 : i64} {
  func.func @_ln_kernel(%arg0: i32, %arg1: memref<16x32xf32, #tpu.memory_space<vmem>>, %arg2: memref<1x32xf32, #tpu.memory_space<vmem>>, %arg3: memref<1x32xf32, #tpu.memory_space<vmem>>, %arg4: memref<16x32xbf16, #tpu.memory_space<vmem>>) attributes {dimension_semantics = [#tpu.dimension_semantics<parallel>], iteration_bounds = array<i64: 1>, scalar_prefetch = 0 : i64, scratch_operands = 0 : i64, tpu.core_type = #tpu.core_type<tc>, window_params = [{transform_indices = @transform_0, window_bounds = array<i64: 16, 32>}, {pipeline_mode = #tpu.pipeline_mode<synchronous>, transform_indices = @transform_1, window_bounds = array<i64: 1, 32>}, {pipeline_mode = #tpu.pipeline_mode<synchronous>, transform_indices = @transform_2, window_bounds = array<i64: 1, 32>}, {transform_indices = @transform_3, window_bounds = array<i64: 16, 32>}]} {
    %c0 = arith.constant 0 : index
    %c0_0 = arith.constant 0 : index
    %0 = vector.load %arg1[%c0, %c0_0] : memref<16x32xf32, #tpu.memory_space<vmem>>, vector<16x32xf32>
    %cst = arith.constant dense<0.000000e+00> : vector<16xf32>
    %1 = vector.multi_reduction <add>, %0, %cst [1] : vector<16x32xf32> to vector<16xf32>
    %2 = vector.shape_cast %1 : vector<16xf32> to vector<16x1xf32>
    %cst_1 = arith.constant 3.200000e+01 : f32
    %3 = vector.broadcast %cst_1 : f32 to vector<16x1xf32>
    %4 = arith.divf %2, %3 : vector<16x1xf32>
    %5 = vector.broadcast %4 : vector<16x1xf32> to vector<16x32xf32>
    %6 = arith.subf %0, %5 : vector<16x32xf32>
    %7 = arith.mulf %6, %6 : vector<16x32xf32>
    %cst_2 = arith.constant dense<0.000000e+00> : vector<16xf32>
    %8 = vector.multi_reduction <add>, %7, %cst_2 [1] : vector<16x32xf32> to vector<16xf32>
    %9 = vector.shape_cast %8 : vector<16xf32> to vector<16x1xf32>
    %cst_3 = arith.constant 3.200000e+01 : f32
    %10 = vector.broadcast %cst_3 : f32 to vector<16x1xf32>
    %11 = arith.divf %9, %10 : vector<16x1xf32>
    %cst_4 = arith.constant 9.99999996E-13 : f32
    %12 = vector.broadcast %cst_4 : f32 to vector<16x1xf32>
    %13 = arith.addf %11, %12 : vector<16x1xf32>
    %14 = math.rsqrt %13 : vector<16x1xf32>
    %15 = vector.broadcast %4 : vector<16x1xf32> to vector<16x32xf32>
    %16 = arith.subf %0, %15 : vector<16x32xf32>
    %17 = vector.broadcast %14 : vector<16x1xf32> to vector<16x32xf32>
    %18 = arith.mulf %16, %17 : vector<16x32xf32>
    %c0_5 = arith.constant 0 : index
    %c0_6 = arith.constant 0 : index
    %19 = vector.load %arg2[%c0_5, %c0_6] : memref<1x32xf32, #tpu.memory_space<vmem>>, vector<1x32xf32>
    %20 = vector.broadcast %19 : vector<1x32xf32> to vector<16x32xf32>
    %21 = arith.mulf %18, %20 : vector<16x32xf32>
    %c0_7 = arith.constant 0 : index
    %c0_8 = arith.constant 0 : index
    %22 = vector.load %arg3[%c0_7, %c0_8] : memref<1x32xf32, #tpu.memory_space<vmem>>, vector<1x32xf32>
    %23 = vector.broadcast %22 : vector<1x32xf32> to vector<16x32xf32>
    %24 = arith.addf %21, %23 : vector<16x32xf32>
    %25 = arith.truncf %24 : vector<16x32xf32> to vector<16x32xbf16>
    %c0_9 = arith.constant 0 : index
    %c0_10 = arith.constant 0 : index
    %26 = vector.load %arg4[%c0_9, %c0_10] : memref<16x32xbf16, #tpu.memory_space<vmem>>, vector<16x32xbf16>
    tpu.vector_store %arg4[%c0_9, %c0_10], %25 {strides = array<i32>} : memref<16x32xbf16, #tpu.memory_space<vmem>>, vector<16x32xbf16>,
    return
  }
  func.func @transform_0(%arg0: i32) -> (i32, i32) {
    %c0_i32 = arith.constant 0 : i32
    %c0_i32_0 = arith.constant 0 : i32
    return %arg0, %c0_i32 : i32, i32
  }
  func.func @transform_1(%arg0: i32) -> (i32, i32) {
    %c0_i32 = arith.constant 0 : i32
    %c0_i32_0 = arith.constant 0 : i32
    %c0_i32_1 = arith.constant 0 : i32
    return %c0_i32, %c0_i32_0 : i32, i32
  }
  func.func @transform_2(%arg0: i32) -> (i32, i32) {
    %c0_i32 = arith.constant 0 : i32
    %c0_i32_0 = arith.constant 0 : i32
    %c0_i32_1 = arith.constant 0 : i32
    return %c0_i32, %c0_i32_0 : i32, i32
  }
  func.func @transform_3(%arg0: i32) -> (i32, i32) {
    %c0_i32 = arith.constant 0 : i32
    %c0_i32_0 = arith.constant 0 : i32
    return %arg0, %c0_i32 : i32, i32
  }
}

</mosaic_0001>

<llo_original>
// kernel: tpu_custom_call.1
$region0: #{tpu_custom_call.1}
  #allocation0 [shape = 'u32[]', space=smem, size = 0x4, offset = 0x4, fixed_abs, tag = 'smem constant byte address 0x4 - core index']
  #allocation1 [shape = 'u32[144,128]{1,0:T(1,128)}', space=vmem, size = 0x12000, scoped, tag = 'internal scratch']
  %s0 = inlined_call_operand.hbm [shape: f32[16,32], index: 0, kind: input, shape index: {}]
  %s1 = inlined_call_operand.vmem [shape: f32[1,32], index: 1, kind: input, shape index: {}]
  %s2 = inlined_call_operand.vmem [shape: f32[1,32], index: 2, kind: input, shape index: {}]
  %s3 = inlined_call_operand.hbm [shape: bf16[16,32], index: 3, kind: output, shape index: {}]
  %s4 = sld [smem:[#allocation0]]
  $region26: #{tpu_custom_call.1} parent=0
    _
  %s6 = ssub.s32 1, %s4
  %s7 = scalar_select 0, %s6, %s4
  $region1: #{tpu_custom_call.1} parent=0
    #allocation2 [shape = 'u8[8192]{0}', space=vmem, size = 0x2000, scoped, tag = 'input window, operand 0, single buffered']
    #allocation3 [shape = 's32[1]{0}', space=sflag, size = 0x4, scoped, tag = 'scoped memory for tpu_custom_call.1']
    #allocation4 [shape = 's32[1]{0}', space=sflag, size = 0x4, scoped, tag = 'scoped memory for tpu_custom_call.1']
    #allocation5 [shape = 'u8[4096]{0}', space=vmem, size = 0x1000, scoped, tag = 'output window, operand 0, single buffered']
    %8 = vsyncpa [#allocation3], 0
    %9 = vsyncpa [#allocation4], 0
    // Predicated region
    $region2: #{tpu_custom_call.1} parent=1 // pred_check
      _
    $region3: #{tpu_custom_call.1} parent=1 // pred_check_branch
      %11 = sbr.rel (0) target = $region5
    $region4: #{tpu_custom_call.1} parent=1 // pred_region
      %s13 = ssub.s32 256, 256
      %14 = vsyncadd [#allocation3], %s13
      %s15 = sshll.u32 [#allocation2], 4
      %s16 = int_to_ptr.vmem [resolvable:$true] %s15
      %21 = dma.hbm_to_vmem [thread:$0]  %s0, 256, %s16, [#allocation3], 128, 128, 8
    $region5: #{tpu_custom_call.1} parent=1 // pred_fallthru
      _
    // Predicated region
    $region6: #{tpu_custom_call.1} parent=1 // pred_check
      _
    $region7: #{tpu_custom_call.1} parent=1 // pred_check_branch
      %23 = sbr.rel (0) target = $region9
    $region8: #{tpu_custom_call.1} parent=1 // pred_region
      _
    $region9: #{tpu_custom_call.1} parent=1 // pred_fallthru
      _
    // Predicated region
    $region10: #{tpu_custom_call.1} parent=1 // pred_check
      _
    $region11: #{tpu_custom_call.1} parent=1 // pred_check_branch
      %25 = sbr.rel (0) target = $region13
    $region12: #{tpu_custom_call.1} parent=1 // pred_region
      _
    $region13: #{tpu_custom_call.1} parent=1 // pred_fallthru
      _
    // Predicated region
    $region14: #{tpu_custom_call.1} parent=1 // pred_check
      _
    $region15: #{tpu_custom_call.1} parent=1 // pred_check_branch
      %27 = sbr.rel (0) target = $region17
    $region16: #{tpu_custom_call.1} parent=1 // pred_region
      %28 = dma.done [#allocation3], 256
    $region17: #{tpu_custom_call.1} parent=1 // pred_fallthru
      _
    %v29 = vld [vmem:[#allocation2] sm:$0xff]
    %v30 = vld [vmem:[#allocation2 + $0x8] sm:$0xff]
    %vm31 = vcmask 261120
    %v32 = vsel %vm31, %v29, 0.0
    %33 = vadd.xlane.f32.xlu0 %v32
    %v34 = vpop.xlane.xlu0 %33
    %v35 = vsel %vm31, %v30, 0.0
    %36 = vadd.xlane.f32.xlu0 %v35
    %v37 = vpop.xlane.xlu0 %36
    %v38 = vrcp.pop 32.0
    %v39 = vmul.f32 %v34, %v38
    %v40 = vmul.f32 %v37, %v38
    %v41 = vsub.f32 %v29, %v39
    %v42 = vsub.f32 %v30, %v40
    %v43 = vmul.f32 %v41, %v41
    %v44 = vmul.f32 %v42, %v42
    %v45 = vsel %vm31, %v43, 0.0
    %46 = vadd.xlane.f32.xlu0 %v45
    %v47 = vpop.xlane.xlu0 %46
    %v48 = vsel %vm31, %v44, 0.0
    %49 = vadd.xlane.f32.xlu0 %v48
    %v50 = vpop.xlane.xlu0 %49
    %v51 = vmul.f32 %v47, %v38
    %v52 = vmul.f32 %v50, %v38
    %v53 = vadd.f32 %v51, 1e-12
    %v54 = vadd.f32 %v52, 1e-12
    %v55 = vrsqrt.pop %v53
    %v56 = vrsqrt.pop %v54
    %v57 = vmul.f32 %v41, %v55
    %v58 = vmul.f32 %v42, %v56
    %v59 = vld [vmem:[%s1] sm:$0x1]
    %v61 = vlaneseq
    %v62 = vshrl.u32 %v61, 7
    %v63 = vsub.s32 0, %v62
    %v64 = vrot.slane %v59, %v63
    %v66 = vmul.f32 %v57, %v64
    %v67 = vmul.f32 %v58, %v64
    %v68 = vld [vmem:[%s2] sm:$0x1]
    %v70 = vlaneseq
    %v71 = vshrl.u32 %v70, 7
    %v72 = vsub.s32 0, %v71
    %v73 = vrot.slane %v68, %v72
    %v75 = vadd.f32 %v66, %v73
    %v76 = vadd.f32 %v67, %v73
    %v77 = vpack.c.bf16 %v76, %v75
    %v79 = vunpack.c.l.b16 %v77
    %v80 = vunpack.c.h.b16 %v77
    %v81 = vpack.c.b16 %v79, %v79
    %v82 = vpack.c.b16 %v80, %v80
    %vm85 = vcmask 257024
    %86 = vst.msk [vmem:[#allocation5] sm:$0xf] %vm85, %v81
    %87 = vst.msk [vmem:[#allocation5 + $0x4] sm:$0xf] %vm85, %v82
    // Predicated region
    $region18: #{tpu_custom_call.1} parent=1 // pred_check
      _
    $region19: #{tpu_custom_call.1} parent=1 // pred_check_branch
      %89 = sbr.rel (0) target = $region21
    $region20: #{tpu_custom_call.1} parent=1 // pred_region
      %s91 = ssub.s32 128, 128
      %92 = vsyncadd [#allocation4], %s91
      %s93 = sshll.u32 [#allocation5], 4
      %s94 = int_to_ptr.vmem [resolvable:$true] %s93
      %99 = dma.vmem_to_hbm [thread:$0]  %s94, 128, %s3, [#allocation4], 64, 64, 4
    $region21: #{tpu_custom_call.1} parent=1 // pred_fallthru
      _
    // Predicated region
    $region22: #{tpu_custom_call.1} parent=1 // pred_check
      _
    $region23: #{tpu_custom_call.1} parent=1 // pred_check_branch
      %101 = sbr.rel (0) target = $region25
    $region24: #{tpu_custom_call.1} parent=1 // pred_region
      %102 = dma.done [#allocation4], 128
    $region25: #{tpu_custom_call.1} parent=1 // pred_fallthru
      _
    %103 = vsyncpa [#allocation3], 1
    %104 = vsyncpa [#allocation4], 1

</llo_original>
